<compile_context>
chip_gen: v7x
topology: tpu7x:2x2x1
jax: 0.10.0
libtpu: 0.0.40
codegen_flags: <defaults>
</compile_context>

<pallas_src>
import jax
import jax.numpy as jnp
from jax.experimental import pallas as pl
from jax.experimental.pallas import tpu as pltpu


def _ceil_to(x, m):
    return ((x + m - 1) // m) * m


def _vmem_block_bytes(shape, itemsize):
    """Rough VMEM footprint of one buffered block, honoring (8, 128) tiling."""
    s = list(shape)
    s[-1] = _ceil_to(s[-1], 128)
    if len(s) >= 2:
        s[-2] = _ceil_to(s[-2], 8)
    n = 1
    for d in s:
        n *= d
    return n * itemsize


def _make_kernel(S, tS, num_St, Bt, matmul_dtype):
    """Builds the kernel body closed over the static tiling parameters."""

    def kernel(hidden_ref, enc_ref, mask_ref, w_h_ref, w_e_ref, bias_ref,
               v_ref, out_ref, hb_sc):
        j = pl.program_id(1)                      # source-tile index (reduction axis)

        # Hoisted hidden projection + bias for this batch tile: (D, Bt).
        @pl.when(j == 0)
        def _():
            hb_sc[...] = (jnp.dot(w_h_ref[...], hidden_ref[...].T,
                                  preferred_element_type=jnp.float32)
                          + bias_ref[...])

        w_e = w_e_ref[...]                        # (D, E2) in matmul dtype
        v_col = v_ref[...]                        # (D, 1)  f32

        # Per-batch-row scores for this source tile, written straight into the
        # resident out block (no one-hot broadcast matmul, no concatenate).
        # TODO(synk): for very large batch tiles, replace this static unroll
        # with a further grid axis.
        for bb in range(Bt):
            # Natural-layout block -> feature-major columns for batch row bb.
            enc_bt = enc_ref[:, bb, :].T.astype(matmul_dtype)          # (E2, tS)
            pre = jnp.dot(w_e, enc_bt,
                          preferred_element_type=jnp.float32)          # (D, tS)
            energy = jnp.tanh(pre + hb_sc[:, bb:bb + 1])               # (D, tS)
            # fc(energy): VPU multiply + cross-sublane reduce (no 1-row matmul).
            row = jnp.sum(energy * v_col, axis=0, keepdims=True)       # (1, tS)
            out_ref[pl.ds(j, 1), pl.ds(bb, 1), :] = row[None]

        # Masked softmax finalize once every source tile of this batch tile is in.
        @pl.when(j == num_St - 1)
        def _():
            scores = out_ref[...]                                      # (num_St, Bt, tS)
            # masked_fill(mask == 0, -1e10)
            scores = jnp.where(mask_ref[...] == 0.0, jnp.float32(-1e10), scores)
            # Columns past the real src_len (ragged last tile) get a far more
            # negative score so they carry exactly zero softmax weight.
            t_idx = jax.lax.broadcasted_iota(jnp.int32, scores.shape, 0)
            l_idx = jax.lax.broadcasted_iota(jnp.int32, scores.shape, 2)
            scores = jnp.where(t_idx * tS + l_idx < S, scores, jnp.float32(-1e30))
            # Numerically stable softmax over all source tiles (axes 0 and 2).
            mx = jnp.max(scores, axis=2, keepdims=True)
            mx = jnp.max(mx, axis=0, keepdims=True)
            ex = jnp.exp(scores - mx)
            denom = jnp.sum(ex, axis=2, keepdims=True)
            denom = jnp.sum(denom, axis=0, keepdims=True)
            out_ref[...] = ex / denom                                  # exact divide

    return kernel


def attention_forward(hidden, encoder_outputs, mask, params,
                      matmul_dtype=jnp.bfloat16, tile_s=512):
    """hidden (B, D), encoder_outputs (S, B, E2), mask (B, S) -> (B, S).

    matmul_dtype: operand dtype of the encoder matmul (default bf16 on all TPU
    generations; accumulation, tanh, masking and softmax stay float32).  The
    encoder tensor is cast per-block inside the kernel, so passing an f32 input
    costs no extra HBM pass; for the full HBM-bytes win, pass encoder_outputs
    already in bf16 from the producer (accuracy/perf trade, ~2e-2 tolerance).
    """
    W = params["attention_weight"]   # (D, D + E2)  cat order: [hidden ; enc_out]
    b = params["attention_bias"]     # (D,)
    v = params["fc_weight"]          # (1, D)

    B, D = hidden.shape
    S, B2, E2 = encoder_outputs.shape
    assert B2 == B, "batch mismatch between hidden and encoder_outputs"

    # --- source tiling (multiple of 128 recommended; last tile may be ragged) ---
    if S <= tile_s:
        tS = S
    else:
        tS = tile_s
    num_St = pl.cdiv(S, tS)

    # --- batch tiling: 8-row (sublane-aligned) tiles when they divide B ---
    Bt = 8 if (B % 8 == 0) else B
    num_Bt = B // Bt

    enc_isize = jnp.dtype(encoder_outputs.dtype).itemsize
    mm_isize = jnp.dtype(matmul_dtype).itemsize

    def vmem_estimate(ts, n_st):
        return (2 * _vmem_block_bytes((ts, Bt, E2), enc_isize)     # enc stream (double-buffered)
                + 2 * _vmem_block_bytes((n_st, Bt, ts), 4)         # resident scores / out
                + 2 * _vmem_block_bytes((n_st, Bt, ts), 4)         # resident mask
                + 2 * _vmem_block_bytes((Bt, D), 4)                # hidden
                + 2 * _vmem_block_bytes((D, D), 4)                 # w_h
                + 2 * _vmem_block_bytes((D, E2), mm_isize)         # w_e
                + 4 * _vmem_block_bytes((D, 1), 4)                 # bias, fc weight
                + _vmem_block_bytes((D, Bt), 4))                   # hb scratch

    # Keep the working set comfortably under v7x's 64 MiB physical VMEM by
    # shrinking the source tile if needed (re-derived budget per the review).
    while vmem_estimate(tS, num_St) > 24 * (1 << 20) and tS > 128:
        tS = max(128, tS // 2)
        num_St = pl.cdiv(S, tS)
    S_pad = num_St * tS
    vmem_limit = int(min(max(2 * vmem_estimate(tS, num_St), 32 * (1 << 20)),
                         64 * (1 << 20)))

    # --- small host-side prep (weights / mask only; NOT the encoder tensor) ---
    w_h = W[:, :D].astype(jnp.float32)                 # hits `hidden`
    w_e = W[:, D:].astype(matmul_dtype)                # hits encoder outputs
    bias_col = b.astype(jnp.float32).reshape(D, 1)
    v_col = v.astype(jnp.float32).reshape(D, 1)
    hidden_f = hidden.astype(jnp.float32)

    mask_f = mask.astype(jnp.float32)
    mask_pad = jnp.pad(mask_f, ((0, 0), (0, S_pad - S)))
    mask3 = jnp.transpose(mask_pad.reshape(B, num_St, tS), (1, 0, 2))   # (num_St, B, tS)

    kernel = _make_kernel(S, tS, num_St, Bt, matmul_dtype)

    out3 = pl.pallas_call(
        kernel,
        out_shape=jax.ShapeDtypeStruct((num_St, B, tS), jnp.float32),
        grid=(num_Bt, num_St),
        in_specs=[
            pl.BlockSpec((Bt, D), lambda bi, j: (bi, 0)),             # hidden
            # Natural layout (S, B, E2); streamed tile-by-tile.  Raise to
            # pipeline_mode=pl.Buffered(3) only if a trace shows exposed DMA.
            pl.BlockSpec((tS, Bt, E2), lambda bi, j: (j, bi, 0)),     # encoder outputs
            pl.BlockSpec((num_St, Bt, tS), lambda bi, j: (0, bi, 0)), # mask (tiled)
            pl.BlockSpec((D, D), lambda bi, j: (0, 0)),               # W[:, :D]
            pl.BlockSpec((D, E2), lambda bi, j: (0, 0)),              # W[:, D:]
            pl.BlockSpec((D, 1), lambda bi, j: (0, 0)),               # bias
            pl.BlockSpec((D, 1), lambda bi, j: (0, 0)),               # fc weight
        ],
        # Resident per batch tile across all source tiles; softmax finalized
        # in-kernel under pl.when(last source tile).
        out_specs=pl.BlockSpec((num_St, Bt, tS), lambda bi, j: (0, bi, 0)),
        scratch_shapes=[pltpu.VMEM((D, Bt), jnp.float32)],
        compiler_params=pltpu.CompilerParams(
            dimension_semantics=("parallel", "arbitrary"),
            vmem_limit_bytes=vmem_limit),
    )(hidden_f, encoder_outputs, mask3, w_h, w_e, bias_col, v_col)

    # Small host-side relayout of the (B, S) attention weights only.
    out = jnp.transpose(out3, (1, 0, 2)).reshape(B, S_pad)[:, :S]
    return out


def attention_reference(hidden, encoder_outputs, mask, params):
    """Pure-JAX reference mirroring the PyTorch forward exactly."""
    W = params["attention_weight"]
    b = params["attention_bias"]
    v = params["fc_weight"]
    S = encoder_outputs.shape[0]
    h = jnp.repeat(hidden[:, None, :], S, axis=1)               # (B, S, D)
    enc = jnp.transpose(encoder_outputs, (1, 0, 2))             # (B, S, E2)
    cat = jnp.concatenate([h, enc.astype(h.dtype)], axis=2)     # (B, S, D+E2)
    energy = jnp.tanh(jnp.einsum("bsk,dk->bsd", cat, W) + b)    # (B, S, D)
    att = jnp.einsum("bsd,od->bso", energy, v)[..., 0]          # (B, S)
    att = jnp.where(mask == 0, -1e10, att)
    return jax.nn.softmax(att, axis=1)


if __name__ == "__main__":
    # ---- Case 1: toy shapes matching the module ----
    enc_hid_dim = 16
    dec_hid_dim = 32
    batch = 2
    src_len = 8
    E2 = enc_hid_dim * 2
    in_dim = E2 + dec_hid_dim

    key = jax.random.PRNGKey(0)
    k1, k2, k3, k4, k5 = jax.random.split(key, 5)

    params = {
        # nn.Linear(enc_hid_dim*2 + dec_hid_dim, dec_hid_dim); cat order (hidden, enc_out)
        "attention_weight": jax.random.normal(k1, (dec_hid_dim, in_dim), jnp.float32) * 0.1,
        "attention_bias": jax.random.normal(k2, (dec_hid_dim,), jnp.float32) * 0.1,
        # nn.Linear(dec_hid_dim, 1, bias=False)
        "fc_weight": jax.random.normal(k3, (1, dec_hid_dim), jnp.float32) * 0.1,
    }
    hidden = jax.random.normal(k4, (batch, dec_hid_dim), jnp.float32)
    encoder_outputs = jax.random.normal(k5, (src_len, batch, E2), jnp.float32)
    mask = jnp.array([[1, 1, 1, 1, 1, 0, 0, 0],
                      [1, 1, 1, 1, 1, 1, 1, 0]], dtype=jnp.float32)

    ref = attention_reference(hidden, encoder_outputs, mask, params)

    # float32 MXU operands: tight check.
    out_f32 = attention_forward(hidden, encoder_outputs, mask, params,
                                matmul_dtype=jnp.float32)
    out_f32 = jax.block_until_ready(out_f32)
    assert out_f32.shape == (batch, src_len)
    assert jnp.allclose(out_f32, ref, atol=5e-4, rtol=5e-4), (out_f32, ref)
    assert jnp.allclose(jnp.sum(out_f32, axis=1), 1.0, atol=1e-4)

    # Default bf16 MXU operands (f32 accumulation / softmax): looser check.
    out_bf16 = attention_forward(hidden, encoder_outputs, mask, params)
    out_bf16 = jax.block_until_ready(out_bf16)
    assert jnp.allclose(out_bf16, ref, atol=2e-2, rtol=2e-2), (out_bf16, ref)
    assert jnp.allclose(jnp.sum(out_bf16, axis=1), 1.0, atol=1e-4)

    # bf16-producer path (encoder outputs already bf16 in HBM -> half the stream).
    out_bf16_in = attention_forward(hidden, encoder_outputs.astype(jnp.bfloat16),
                                    mask, params)
    out_bf16_in = jax.block_until_ready(out_bf16_in)
    assert jnp.allclose(out_bf16_in, ref, atol=2e-2, rtol=2e-2)

    # ---- Case 2: larger shapes exercising batch/source tiling, ragged tail,
    #      the in-kernel softmax finalize and a fully-masked row ----
    B2, S2, D2, E2b = 16, 300, 48, 64
    kk = jax.random.split(jax.random.PRNGKey(1), 6)
    params2 = {
        "attention_weight": jax.random.normal(kk[0], (D2, D2 + E2b), jnp.float32) * 0.05,
        "attention_bias": jax.random.normal(kk[1], (D2,), jnp.float32) * 0.05,
        "fc_weight": jax.random.normal(kk[2], (1, D2), jnp.float32) * 0.05,
    }
    hidden2 = jax.random.normal(kk[3], (B2, D2), jnp.float32)
    enc2 = jax.random.normal(kk[4], (S2, B2, E2b), jnp.float32)
    lens = jax.random.randint(kk[5], (B2,), 1, S2 + 1)
    lens = lens.at[0].set(0)     # one fully-masked row (uniform softmax edge case)
    mask2 = (jnp.arange(S2)[None, :] < lens[:, None]).astype(jnp.float32)

    ref2 = attention_reference(hidden2, enc2, mask2, params2)
    out2 = attention_forward(hidden2, enc2, mask2, params2,
                             matmul_dtype=jnp.float32, tile_s=128)
    out2 = jax.block_until_ready(out2)
    assert out2.shape == (B2, S2)
    assert jnp.allclose(out2, ref2, atol=5e-4, rtol=5e-4)
    assert jnp.allclose(jnp.sum(out2, axis=1), 1.0, atol=1e-4)

    print("KERNEL_OK")
</pallas_src>

<mosaic_0001>
module attributes {stable_mosaic.version = 11 : i64} {
  func.func @kernel(%arg0: i32, %arg1: i32, %arg2: memref<2x32xf32, #tpu.memory_space<vmem>>, %arg3: memref<8x2x32xf32, #tpu.memory_space<vmem>>, %arg4: memref<1x2x8xf32, #tpu.memory_space<vmem>>, %arg5: memref<32x32xf32, #tpu.memory_space<vmem>>, %arg6: memref<32x32xf32, #tpu.memory_space<vmem>>, %arg7: memref<32x1xf32, #tpu.memory_space<vmem>>, %arg8: memref<32x1xf32, #tpu.memory_space<vmem>>, %arg9: memref<1x2x8xf32, #tpu.memory_space<vmem>>, %arg10: memref<32x2xf32, #tpu.memory_space<vmem>>) attributes {dimension_semantics = [#tpu.dimension_semantics<parallel>, #tpu.dimension_semantics<arbitrary>], iteration_bounds = array<i64: 1, 1>, scalar_prefetch = 0 : i64, scratch_operands = 1 : i64, tpu.core_type = #tpu.core_type<tc>, window_params = [{transform_indices = @transform_0, window_bounds = array<i64: 2, 32>}, {transform_indices = @transform_1, window_bounds = array<i64: 8, 2, 32>}, {transform_indices = @transform_2, window_bounds = array<i64: 1, 2, 8>}, {pipeline_mode = #tpu.pipeline_mode<synchronous>, transform_indices = @transform_3, window_bounds = array<i64: 32, 32>}, {pipeline_mode = #tpu.pipeline_mode<synchronous>, transform_indices = @transform_4, window_bounds = array<i64: 32, 32>}, {pipeline_mode = #tpu.pipeline_mode<synchronous>, transform_indices = @transform_5, window_bounds = array<i64: 32, 1>}, {pipeline_mode = #tpu.pipeline_mode<synchronous>, transform_indices = @transform_6, window_bounds = array<i64: 32, 1>}, {transform_indices = @transform_7, window_bounds = array<i64: 1, 2, 8>}]} {
    %c0_i32 = arith.constant 0 : i32
    %0 = arith.cmpi eq, %arg1, %c0_i32 : i32
    %1 = arith.extui %0 : i1 to i32
    %c0_i32_0 = arith.constant 0 : i32
    %2 = arith.cmpi ne, %1, %c0_i32_0 : i32
    scf.if %2 {
      %c0_22 = arith.constant 0 : index
      %c0_23 = arith.constant 0 : index
      %38 = vector.load %arg5[%c0_22, %c0_23] : memref<32x32xf32, #tpu.memory_space<vmem>>, vector<32x32xf32>
      %c0_24 = arith.constant 0 : index
      %c0_25 = arith.constant 0 : index
      %39 = vector.load %arg2[%c0_24, %c0_25] : memref<2x32xf32, #tpu.memory_space<vmem>>, vector<2x32xf32>
      %40 = tpu.transpose %39, [1, 0] : vector<2x32xf32> -> vector<32x2xf32>
      %cst_26 = arith.constant dense<0.000000e+00> : vector<32x2xf32>
      %41 = tpu.matmul %38, %40, %cst_26 {dimension_numbers = #tpu.dot_dimension_numbers<[1], [0], [0], [1], [0, 0, 1, 1], [], []>} : vector<32x32xf32>, vector<32x2xf32>, vector<32x2xf32> -> vector<32x2xf32>
      %c0_27 = arith.constant 0 : index
      %c0_28 = arith.constant 0 : index
      %42 = vector.load %arg7[%c0_27, %c0_28] : memref<32x1xf32, #tpu.memory_space<vmem>>, vector<32x1xf32>
      %43 = vector.broadcast %42 : vector<32x1xf32> to vector<32x2xf32>
      %44 = arith.addf %41, %43 : vector<32x2xf32>
      %c0_29 = arith.constant 0 : index
      %c0_30 = arith.constant 0 : index
      %45 = vector.load %arg10[%c0_29, %c0_30] : memref<32x2xf32, #tpu.memory_space<vmem>>, vector<32x2xf32>
      tpu.vector_store %arg10[%c0_29, %c0_30], %44 {strides = array<i32>} : memref<32x2xf32, #tpu.memory_space<vmem>>, vector<32x2xf32>,
    } else {
    }
    %c0 = arith.constant 0 : index
    %c0_1 = arith.constant 0 : index
    %3 = vector.load %arg6[%c0, %c0_1] : memref<32x32xf32, #tpu.memory_space<vmem>>, vector<32x32xf32>
    %c0_2 = arith.constant 0 : index
    %c0_3 = arith.constant 0 : index
    %4 = vector.load %arg8[%c0_2, %c0_3] : memref<32x1xf32, #tpu.memory_space<vmem>>, vector<32x1xf32>
    %c0_4 = arith.constant 0 : index
    %c0_5 = arith.constant 0 : index
    %c0_6 = arith.constant 0 : index
    %5 = vector.load %arg3[%c0_4, %c0_5, %c0_6] : memref<8x2x32xf32, #tpu.memory_space<vmem>>, vector<8x1x32xf32>
    %6 = vector.shape_cast %5 : vector<8x1x32xf32> to vector<8x32xf32>
    %7 = tpu.transpose %6, [1, 0] : vector<8x32xf32> -> vector<32x8xf32>
    %cst = arith.constant dense<0.000000e+00> : vector<32x8xf32>
    %8 = tpu.matmul %3, %7, %cst {dimension_numbers = #tpu.dot_dimension_numbers<[1], [0], [0], [1], [0, 0, 1, 1], [], []>} : vector<32x32xf32>, vector<32x8xf32>, vector<32x8xf32> -> vector<32x8xf32>
    %c0_7 = arith.constant 0 : index
    %c0_8 = arith.constant 0 : index
    %9 = vector.load %arg10[%c0_7, %c0_8] : memref<32x2xf32, #tpu.memory_space<vmem>>, vector<32x1xf32>
    %10 = vector.broadcast %9 : vector<32x1xf32> to vector<32x8xf32>
    %11 = arith.addf %8, %10 : vector<32x8xf32>
    %12 = math.tanh %11 : vector<32x8xf32>
    %13 = vector.broadcast %4 : vector<32x1xf32> to vector<32x8xf32>
    %14 = arith.mulf %12, %13 : vector<32x8xf32>
    %cst_9 = arith.constant dense<0.000000e+00> : vector<8xf32>
    %15 = vector.multi_reduction <add>, %14, %cst_9 [0] : vector<32x8xf32> to vector<8xf32>
    %16 = vector.shape_cast %15 : vector<8xf32> to vector<1x8xf32>
    %17 = vector.shape_cast %16 : vector<1x8xf32> to vector<1x1x8xf32>
    %18 = arith.index_cast %arg1 : i32 to index
    %c0_10 = arith.constant 0 : index
    %c0_11 = arith.constant 0 : index
    %19 = vector.load %arg9[%18, %c0_10, %c0_11] : memref<1x2x8xf32, #tpu.memory_space<vmem>>, vector<1x1x8xf32>
    tpu.vector_store %arg9[%18, %c0_10, %c0_11], %17 {strides = array<i32>} : memref<1x2x8xf32, #tpu.memory_space<vmem>>, vector<1x1x8xf32>,
    %c0_12 = arith.constant 0 : index
    %c1 = arith.constant 1 : index
    %c0_13 = arith.constant 0 : index
    %20 = vector.load %arg3[%c0_12, %c1, %c0_13] : memref<8x2x32xf32, #tpu.memory_space<vmem>>, vector<8x1x32xf32>
    %21 = vector.shape_cast %20 : vector<8x1x32xf32> to vector<8x32xf32>
    %22 = tpu.transpose %21, [1, 0] : vector<8x32xf32> -> vector<32x8xf32>
    %cst_14 = arith.constant dense<0.000000e+00> : vector<32x8xf32>
    %23 = tpu.matmul %3, %22, %cst_14 {dimension_numbers = #tpu.dot_dimension_numbers<[1], [0], [0], [1], [0, 0, 1, 1], [], []>} : vector<32x32xf32>, vector<32x8xf32>, vector<32x8xf32> -> vector<32x8xf32>
    %c0_15 = arith.constant 0 : index
    %c1_16 = arith.constant 1 : index
    %24 = vector.load %arg10[%c0_15, %c1_16] : memref<32x2xf32, #tpu.memory_space<vmem>>, vector<32x1xf32>
    %25 = vector.broadcast %24 : vector<32x1xf32> to vector<32x8xf32>
    %26 = arith.addf %23, %25 : vector<32x8xf32>
    %27 = math.tanh %26 : vector<32x8xf32>
    %28 = vector.broadcast %4 : vector<32x1xf32> to vector<32x8xf32>
    %29 = arith.mulf %27, %28 : vector<32x8xf32>
    %cst_17 = arith.constant dense<0.000000e+00> : vector<8xf32>
    %30 = vector.multi_reduction <add>, %29, %cst_17 [0] : vector<32x8xf32> to vector<8xf32>
    %31 = vector.shape_cast %30 : vector<8xf32> to vector<1x8xf32>
    %32 = vector.shape_cast %31 : vector<1x8xf32> to vector<1x1x8xf32>
    %33 = arith.index_cast %arg1 : i32 to index
    %c1_18 = arith.constant 1 : index
    %c0_19 = arith.constant 0 : index
    %34 = vector.load %arg9[%33, %c1_18, %c0_19] : memref<1x2x8xf32, #tpu.memory_space<vmem>>, vector<1x1x8xf32>
    tpu.vector_store %arg9[%33, %c1_18, %c0_19], %32 {strides = array<i32>} : memref<1x2x8xf32, #tpu.memory_space<vmem>>, vector<1x1x8xf32>,
    %c0_i32_20 = arith.constant 0 : i32
    %35 = arith.cmpi eq, %arg1, %c0_i32_20 : i32
    %36 = arith.extui %35 : i1 to i32
    %c0_i32_21 = arith.constant 0 : i32
    %37 = arith.cmpi ne, %36, %c0_i32_21 : i32
    scf.if %37 {
      %c0_22 = arith.constant 0 : index
      %c0_23 = arith.constant 0 : index
      %c0_24 = arith.constant 0 : index
      %38 = vector.load %arg9[%c0_22, %c0_23, %c0_24] : memref<1x2x8xf32, #tpu.memory_space<vmem>>, vector<1x2x8xf32>
      %c0_25 = arith.constant 0 : index
      %c0_26 = arith.constant 0 : index
      %c0_27 = arith.constant 0 : index
      %39 = vector.load %arg4[%c0_25, %c0_26, %c0_27] : memref<1x2x8xf32, #tpu.memory_space<vmem>>, vector<1x2x8xf32>
      %cst_28 = arith.constant 0.000000e+00 : f32
      %40 = vector.broadcast %cst_28 : f32 to vector<1x2x8xf32>
      %41 = arith.cmpf oeq, %39, %40 : vector<1x2x8xf32>
      %cst_29 = arith.constant -1.000000e+10 : f32
      %42 = vector.broadcast %cst_29 : f32 to vector<1x2x8xf32>
      %43 = arith.select %41, %42, %38 : vector<1x2x8xi1>, vector<1x2x8xf32>
      %44 = tpu.iota {dimensions = array<i32: 0>} : vector<1x2x8xi32>
      %45 = tpu.iota {dimensions = array<i32: 2>} : vector<1x2x8xi32>
      %c8_i32 = arith.constant 8 : i32
      %46 = vector.broadcast %c8_i32 : i32 to vector<1x2x8xi32>
      %47 = arith.muli %44, %46 : vector<1x2x8xi32>
      %48 = arith.addi %47, %45 : vector<1x2x8xi32>
      %c8_i32_30 = arith.constant 8 : i32
      %49 = vector.broadcast %c8_i32_30 : i32 to vector<1x2x8xi32>
      %50 = arith.cmpi slt, %48, %49 : vector<1x2x8xi32>
      %cst_31 = arith.constant -1.000000e+30 : f32
      %51 = vector.broadcast %cst_31 : f32 to vector<1x2x8xf32>
      %52 = arith.select %50, %43, %51 : vector<1x2x8xi1>, vector<1x2x8xf32>
      %cst_32 = arith.constant dense<0xFF800000> : vector<1x2xf32>
      %53 = vector.multi_reduction <maximumf>, %52, %cst_32 [2] : vector<1x2x8xf32> to vector<1x2xf32>
      %54 = vector.shape_cast %53 : vector<1x2xf32> to vector<1x2x1xf32>
      %cst_33 = arith.constant dense<0xFF800000> : vector<2x1xf32>
      %55 = vector.multi_reduction <maximumf>, %54, %cst_33 [0] : vector<1x2x1xf32> to vector<2x1xf32>
      %56 = vector.shape_cast %55 : vector<2x1xf32> to vector<1x2x1xf32>
      %57 = vector.broadcast %56 : vector<1x2x1xf32> to vector<1x2x8xf32>
      %58 = arith.subf %52, %57 : vector<1x2x8xf32>
      %59 = math.exp %58 : vector<1x2x8xf32>
      %cst_34 = arith.constant dense<0.000000e+00> : vector<1x2xf32>
      %60 = vector.multi_reduction <add>, %59, %cst_34 [2] : vector<1x2x8xf32> to vector<1x2xf32>
      %61 = vector.shape_cast %60 : vector<1x2xf32> to vector<1x2x1xf32>
      %cst_35 = arith.constant dense<0.000000e+00> : vector<2x1xf32>
      %62 = vector.multi_reduction <add>, %61, %cst_35 [0] : vector<1x2x1xf32> to vector<2x1xf32>
      %63 = vector.shape_cast %62 : vector<2x1xf32> to vector<1x2x1xf32>
      %64 = vector.broadcast %63 : vector<1x2x1xf32> to vector<1x2x8xf32>
      %65 = arith.divf %59, %64 : vector<1x2x8xf32>
      %c0_36 = arith.constant 0 : index
      %c0_37 = arith.constant 0 : index
      %c0_38 = arith.constant 0 : index
      %66 = vector.load %arg9[%c0_36, %c0_37, %c0_38] : memref<1x2x8xf32, #tpu.memory_space<vmem>>, vector<1x2x8xf32>
      tpu.vector_store %arg9[%c0_36, %c0_37, %c0_38], %65 {strides = array<i32>} : memref<1x2x8xf32, #tpu.memory_space<vmem>>, vector<1x2x8xf32>,
    } else {
    }
    return
  }
  func.func @transform_0(%arg0: i32, %arg1: i32) -> (i32, i32) {
    %c0_i32 = arith.constant 0 : i32
    %c0_i32_0 = arith.constant 0 : i32
    return %arg0, %c0_i32 : i32, i32
  }
  func.func @transform_1(%arg0: i32, %arg1: i32) -> (i32, i32, i32) {
    %c0_i32 = arith.constant 0 : i32
    %c0_i32_0 = arith.constant 0 : i32
    return %arg1, %arg0, %c0_i32 : i32, i32, i32
  }
  func.func @transform_2(%arg0: i32, %arg1: i32) -> (i32, i32, i32) {
    %c0_i32 = arith.constant 0 : i32
    %c0_i32_0 = arith.constant 0 : i32
    %c0_i32_1 = arith.constant 0 : i32
    return %c0_i32, %arg0, %c0_i32_0 : i32, i32, i32
  }
  func.func @transform_3(%arg0: i32, %arg1: i32) -> (i32, i32) {
    %c0_i32 = arith.constant 0 : i32
    %c0_i32_0 = arith.constant 0 : i32
    %c0_i32_1 = arith.constant 0 : i32
    return %c0_i32, %c0_i32_0 : i32, i32
  }
  func.func @transform_4(%arg0: i32, %arg1: i32) -> (i32, i32) {
    %c0_i32 = arith.constant 0 : i32
    %c0_i32_0 = arith.constant 0 : i32
    %c0_i32_1 = arith.constant 0 : i32
    return %c0_i32, %c0_i32_0 : i32, i32
  }
  func.func @transform_5(%arg0: i32, %arg1: i32) -> (i32, i32) {
    %c0_i32 = arith.constant 0 : i32
    %c0_i32_0 = arith.constant 0 : i32
    %c0_i32_1 = arith.constant 0 : i32
    return %c0_i32, %c0_i32_0 : i32, i32
  }
  func.func @transform_6(%arg0: i32, %arg1: i32) -> (i32, i32) {
    %c0_i32 = arith.constant 0 : i32
    %c0_i32_0 = arith.constant 0 : i32
    %c0_i32_1 = arith.constant 0 : i32
    return %c0_i32, %c0_i32_0 : i32, i32
  }
  func.func @transform_7(%arg0: i32, %arg1: i32) -> (i32, i32, i32) {
    %c0_i32 = arith.constant 0 : i32
    %c0_i32_0 = arith.constant 0 : i32
    %c0_i32_1 = arith.constant 0 : i32
    return %c0_i32, %arg0, %c0_i32_0 : i32, i32, i32
  }
}

</mosaic_0001>

<llo_original>
// kernel: tpu_custom_call.1
$region0: #{tpu_custom_call.1}
  #allocation0 [shape = 'u32[]', space=smem, size = 0x4, offset = 0x4, fixed_abs, tag = 'smem constant byte address 0x4 - core index']
  #allocation1 [shape = 'u32[144,128]{1,0:T(1,128)}', space=vmem, size = 0x12000, scoped, tag = 'internal scratch']
  #allocation2 [shape = 'f32[32,2]{1,0:T(8,128)}', space=vmem, size = 0x4000, scoped, tag = 'scratch operand']
  %s0 = inlined_call_operand.hbm [shape: f32[2,32], index: 0, kind: input, shape index: {}]
  %s1 = inlined_call_operand.hbm [shape: f32[8,2,32], index: 1, kind: input, shape index: {}]
  %s2 = inlined_call_operand.vmem [shape: f32[1,2,8], index: 2, kind: input, shape index: {}]
  %s3 = inlined_call_operand.vmem [shape: f32[32,32], index: 3, kind: input, shape index: {}]
  %s4 = inlined_call_operand.vmem [shape: f32[32,32], index: 4, kind: input, shape index: {}]
  %s5 = inlined_call_operand.vmem [shape: f32[32,1], index: 5, kind: input, shape index: {}]
  %s6 = inlined_call_operand.vmem [shape: f32[32,1], index: 6, kind: input, shape index: {}]
  %s7 = inlined_call_operand.hbm [shape: f32[1,2,8], index: 7, kind: output, shape index: {}]
  %s8 = sld [smem:[#allocation0]]
  $region54: #{tpu_custom_call.1} parent=0
    _
  %s10 = ssub.s32 1, %s8
  %s11 = scalar_select 0, %s10, %s8
  $region1: #{tpu_custom_call.1} parent=0
    #allocation3 [shape = 'u8[1024]{0}', space=vmem, size = 0x400, scoped, tag = 'input window, operand 0, single buffered']
    #allocation4 [shape = 's32[1]{0}', space=sflag, size = 0x4, scoped, tag = 'scoped memory for tpu_custom_call.1']
    #allocation5 [shape = 's32[1]{0}', space=sflag, size = 0x4, scoped, tag = 'scoped memory for tpu_custom_call.1']
    #allocation6 [shape = 'u8[8192]{0}', space=vmem, size = 0x2000, scoped, tag = 'input window, operand 1, single buffered']
    #allocation7 [shape = 's32[1]{0}', space=sflag, size = 0x4, scoped, tag = 'scoped memory for tpu_custom_call.1']
    #allocation8 [shape = 'u8[1024]{0}', space=vmem, size = 0x400, scoped, tag = 'output window, operand 0, single buffered']
    %12 = vsyncpa [#allocation4], 0
    %13 = vsyncpa [#allocation7], 0
    %14 = vsyncpa [#allocation5], 0
    // Predicated region
    $region2: #{tpu_custom_call.1} parent=1 // pred_check
      _
    $region3: #{tpu_custom_call.1} parent=1 // pred_check_branch
      %16 = sbr.rel (0) target = $region5
    $region4: #{tpu_custom_call.1} parent=1 // pred_region
      %s18 = ssub.s32 32, 32
      %19 = vsyncadd [#allocation4], %s18
      %s21 = sshll.u32 [#allocation3], 4
      %s22 = int_to_ptr.vmem [resolvable:$true] %s21
      %24 = dma.hbm_to_vmem [thread:$0]  %s0, 32, %s22, [#allocation4]
    $region5: #{tpu_custom_call.1} parent=1 // pred_fallthru
      _
    // Predicated region
    $region6: #{tpu_custom_call.1} parent=1 // pred_check
      _
    $region7: #{tpu_custom_call.1} parent=1 // pred_check_branch
      %26 = sbr.rel (0) target = $region9
    $region8: #{tpu_custom_call.1} parent=1 // pred_region
      %s28 = ssub.s32 256, 256
      %29 = vsyncadd [#allocation7], %s28
      %s30 = sshll.u32 [#allocation6], 4
      %s31 = int_to_ptr.vmem [resolvable:$true] %s30
      %36 = dma.hbm_to_vmem [thread:$0]  %s1, 256, %s31, [#allocation7], 32, 32, 2
    $region9: #{tpu_custom_call.1} parent=1 // pred_fallthru
      _
    // Predicated region
    $region10: #{tpu_custom_call.1} parent=1 // pred_check
      _
    $region11: #{tpu_custom_call.1} parent=1 // pred_check_branch
      %38 = sbr.rel (0) target = $region13
    $region12: #{tpu_custom_call.1} parent=1 // pred_region
      _
    $region13: #{tpu_custom_call.1} parent=1 // pred_fallthru
      _
    // Predicated region
    $region14: #{tpu_custom_call.1} parent=1 // pred_check
      _
    $region15: #{tpu_custom_call.1} parent=1 // pred_check_branch
      %40 = sbr.rel (0) target = $region17
    $region16: #{tpu_custom_call.1} parent=1 // pred_region
      _
    $region17: #{tpu_custom_call.1} parent=1 // pred_fallthru
      _
    // Predicated region
    $region18: #{tpu_custom_call.1} parent=1 // pred_check
      _
    $region19: #{tpu_custom_call.1} parent=1 // pred_check_branch
      %42 = sbr.rel (0) target = $region21
    $region20: #{tpu_custom_call.1} parent=1 // pred_region
      _
    $region21: #{tpu_custom_call.1} parent=1 // pred_fallthru
      _
    // Predicated region
    $region22: #{tpu_custom_call.1} parent=1 // pred_check
      _
    $region23: #{tpu_custom_call.1} parent=1 // pred_check_branch
      %44 = sbr.rel (0) target = $region25
    $region24: #{tpu_custom_call.1} parent=1 // pred_region
      _
    $region25: #{tpu_custom_call.1} parent=1 // pred_fallthru
      _
    // Predicated region
    $region26: #{tpu_custom_call.1} parent=1 // pred_check
      _
    $region27: #{tpu_custom_call.1} parent=1 // pred_check_branch
      %46 = sbr.rel (0) target = $region29
    $region28: #{tpu_custom_call.1} parent=1 // pred_region
      _
    $region29: #{tpu_custom_call.1} parent=1 // pred_fallthru
      _
    // Predicated region
    $region30: #{tpu_custom_call.1} parent=1 // pred_check
      _
    $region31: #{tpu_custom_call.1} parent=1 // pred_check_branch
      %48 = sbr.rel (0) target = $region33
    $region32: #{tpu_custom_call.1} parent=1 // pred_region
      %49 = dma.done [#allocation4], 32
    $region33: #{tpu_custom_call.1} parent=1 // pred_fallthru
      _
    // Predicated region
    $region34: #{tpu_custom_call.1} parent=1 // pred_check
      _
    $region35: #{tpu_custom_call.1} parent=1 // pred_check_branch
      %51 = sbr.rel (0) target = $region37
    $region36: #{tpu_custom_call.1} parent=1 // pred_region
      %52 = dma.done [#allocation7], 256
    $region37: #{tpu_custom_call.1} parent=1 // pred_fallthru
      _
    %p53 = scmp.eq.s32.totalorder 0, 0
    // Predicated region
    $region38: #{tpu_custom_call.1} parent=1 // pred_check
      %p54 = pneg %p53
    $region39: #{tpu_custom_call.1} parent=1 // pred_check_branch
      %56 = sbr.rel (%p54) target = $region41
    $region40: #{tpu_custom_call.1} parent=1 // pred_region
      %v57 = vld [vmem:[%s3] sm:$0xff]
      %v58 = vld [vmem:[%s3 + $0x8] sm:$0xff]
      %v59 = vld [vmem:[%s3 + $0x10] sm:$0xff]
      %v60 = vld [vmem:[%s3 + $0x18] sm:$0xff]
      %v61 = vld [vmem:[#allocation3] sm:$0x3]
      %v62 = vld [vmem:[%s5] sm:$0xff]
      %v63 = vld [vmem:[%s5 + $0x8] sm:$0xff]
      %v64 = vld [vmem:[%s5 + $0x10] sm:$0xff]
      %v65 = vld [vmem:[%s5 + $0x18] sm:$0xff]
      %67 = vset.pattern.permute.xlu0 0
      %68 = vperm.xlu0 %67, %v62
      %v69 = vpop.permute.xlu0 %68
      %72 = vset.pattern.permute.xlu0 0
      %73 = vperm.xlu0 %72, %v63
      %v74 = vpop.permute.xlu0 %73
      %77 = vset.pattern.permute.xlu0 0
      %78 = vperm.xlu0 %77, %v64
      %v79 = vpop.permute.xlu0 %78
      %82 = vset.pattern.permute.xlu0 0
      %83 = vperm.xlu0 %82, %v65
      %v84 = vpop.permute.xlu0 %83
      %vm86 = vcmask 261120
      %v88 = vsel %vm86, %v57, 0
      %v91 = vsel %vm86, %v58, 0
      %v94 = vsel %vm86, %v59, 0
      %v97 = vsel %vm86, %v60, 0
      %v100 = vsel %vm86, %v61, 0
      %102 = vmatprep.subr.mxu0 0.0
      %103 = vmatpush1.xpose.msra.mxu0 %v100
      %104 = vmatprep.subr.mxu0 0.0
      %105 = vmatpush1.xpose.msra.mxu0 0.0
      %106 = vmatprep.subr.mxu0 0.0
      %107 = vmatpush1.xpose.msra.mxu0 0.0
      %108 = vmatprep.subr.mxu0 0.0
      %109 = vmatpush1.xpose.msra.mxu0 0.0
      %110 = vmatprep.subr.mxu0 0.0
      %111 = vmatpush1.xpose.msra.mxu0 0.0
      %112 = vmatprep.subr.mxu0 0.0
      %113 = vmatpush1.xpose.msra.mxu0 0.0
      %114 = vmatprep.subr.mxu0 0.0
      %115 = vmatpush1.xpose.msra.mxu0 0.0
      %116 = vmatprep.subr.mxu0 0.0
      %117 = vmatpush1.xpose.msra.mxu0 0.0
      %118 = vmatprep.subr.mxu0 0.0
      %119 = vmatpush1.xpose.msra.mxu0 0.0
      %120 = vmatprep.subr.mxu0 0.0
      %121 = vmatpush1.xpose.msra.mxu0 0.0
      %122 = vmatprep.subr.mxu0 0.0
      %123 = vmatpush1.xpose.msra.mxu0 0.0
      %124 = vmatprep.subr.mxu0 0.0
      %125 = vmatpush1.xpose.msra.mxu0 0.0
      %126 = vmatprep.subr.mxu0 0.0
      %127 = vmatpush1.xpose.msra.mxu0 0.0
      %128 = vmatprep.subr.mxu0 0.0
      %129 = vmatpush1.xpose.msra.mxu0 0.0
      %130 = vmatprep.subr.mxu0 0.0
      %131 = vmatpush1.xpose.msra.mxu0 0.0
      %132 = vmatprep.subr.mxu0 0.0
      %133 = vmatpush1.xpose.msra.mxu0 0.0
      %134 = vmatprep.subr.mxu0 0.0
      %135 = vmatpush1.xpose.msra.mxu0 0.0
      %136 = vmatprep.subr.mxu0 0.0
      %137 = vmatpush1.xpose.msra.mxu0 0.0
      %138 = vmatprep.subr.mxu0 0.0
      %139 = vmatpush1.xpose.msra.mxu0 0.0
      %140 = vmatprep.subr.mxu0 0.0
      %141 = vmatpush1.xpose.msra.mxu0 0.0
      %142 = vmatprep.subr.mxu0 0.0
      %143 = vmatpush1.xpose.msra.mxu0 0.0
      %144 = vmatprep.subr.mxu0 0.0
      %145 = vmatpush1.xpose.msra.mxu0 0.0
      %146 = vmatprep.subr.mxu0 0.0
      %147 = vmatpush1.xpose.msra.mxu0 0.0
      %148 = vmatprep.subr.mxu0 0.0
      %149 = vmatpush1.xpose.msra.mxu0 0.0
      %150 = vmatprep.subr.mxu0 0.0
      %151 = vmatpush1.xpose.msra.mxu0 0.0
      %152 = vmatprep.subr.mxu0 0.0
      %153 = vmatpush1.xpose.msra.mxu0 0.0
      %154 = vmatprep.subr.mxu0 0.0
      %155 = vmatpush1.xpose.msra.mxu0 0.0
      %156 = vmatprep.subr.mxu0 0.0
      %157 = vmatpush1.xpose.msra.mxu0 0.0
      %158 = vmatprep.subr.mxu0 0.0
      %159 = vmatpush1.xpose.msra.mxu0 0.0
      %160 = vmatprep.subr.mxu0 0.0
      %161 = vmatpush1.xpose.msra.mxu0 0.0
      %162 = vmatprep.subr.mxu0 0.0
      %163 = vmatpush1.xpose.msra.mxu0 0.0
      %164 = vmatprep.subr.mxu0 0.0
      %165 = vmatpush1.xpose.msra.mxu0 0.0
      %166 = vmatprep.mubr.f32.mxu0 0.0
      %167 = vmatmul.mubr.f32.gmra.mrb[0].mxu0 %v88
      %v168 = vpop.f32.mrb[0].mxu0
      %v169 = vadd.f32 %v69, %v168
      %v170 = vpop.f32.mrb[0].mxu0
      %171 = vmatprep.mubr.f32.mxu0 0.0
      %172 = vmatmul.mubr.f32.gmra.mrb[0].mxu0 %v91
      %v173 = vpop.f32.mrb[0].mxu0
      %v174 = vadd.f32 %v74, %v173
      %v175 = vpop.f32.mrb[0].mxu0
      %176 = vmatprep.mubr.f32.mxu0 0.0
      %177 = vmatmul.mubr.f32.gmra.mrb[0].mxu0 %v94
      %v178 = vpop.f32.mrb[0].mxu0
      %v179 = vadd.f32 %v79, %v178
      %v180 = vpop.f32.mrb[0].mxu0
      %181 = vmatprep.mubr.f32.mxu0 0.0
      %182 = vmatmul.mubr.f32.gmra.mrb[0].mxu0 %v97
      %v183 = vpop.f32.mrb[0].mxu0
      %v184 = vadd.f32 %v84, %v183
      %v185 = vpop.f32.mrb[0].mxu0
      %186 = vdwg.mxu0
      %vm187 = vcmask 15360
      %188 = vst.msk [vmem:[#allocation2] sm:$0xff] %vm187, %v169
      %189 = vst.msk [vmem:[#allocation2 + $0x8] sm:$0xff] %vm187, %v174
      %190 = vst.msk [vmem:[#allocation2 + $0x10] sm:$0xff] %vm187, %v179
      %191 = vst.msk [vmem:[#allocation2 + $0x18] sm:$0xff] %vm187, %v184
    $region41: #{tpu_custom_call.1} parent=1 // pred_fallthru
      _
    %v192 = vld [vmem:[%s4] sm:$0xff]
    %v193 = vld [vmem:[%s4 + $0x8] sm:$0xff]
    %v194 = vld [vmem:[%s4 + $0x10] sm:$0xff]
    %v195 = vld [vmem:[%s4 + $0x18] sm:$0xff]
    %v196 = vld [vmem:[%s6] sm:$0xff]
    %v197 = vld [vmem:[%s6 + $0x8] sm:$0xff]
    %v198 = vld [vmem:[%s6 + $0x10] sm:$0xff]
    %v199 = vld [vmem:[%s6 + $0x18] sm:$0xff]
    %v200 = vld [vmem:[#allocation6] sm:$0x1]
    %v201 = vld [vmem:[#allocation6 + $0x2] sm:$0x1]
    %v202 = vld [vmem:[#allocation6 + $0x4] sm:$0x1]
    %v203 = vld [vmem:[#allocation6 + $0x6] sm:$0x1]
    %v204 = vld [vmem:[#allocation6 + $0x8] sm:$0x1]
    %v205 = vld [vmem:[#allocation6 + $0xa] sm:$0x1]
    %v206 = vld [vmem:[#allocation6 + $0xc] sm:$0x1]
    %v207 = vld [vmem:[#allocation6 + $0xe] sm:$0x1]
    %v208 = vld [vmem:[#allocation2] sm:$0xff]
    %v209 = vld [vmem:[#allocation2 + $0x8] sm:$0xff]
    %v210 = vld [vmem:[#allocation2 + $0x10] sm:$0xff]
    %v211 = vld [vmem:[#allocation2 + $0x18] sm:$0xff]
    %213 = vset.pattern.permute.xlu0 0
    %214 = vperm.xlu0 %213, %v208
    %v215 = vpop.permute.xlu0 %214
    %218 = vset.pattern.permute.xlu0 0
    %219 = vperm.xlu0 %218, %v209
    %v220 = vpop.permute.xlu0 %219
    %223 = vset.pattern.permute.xlu0 0
    %224 = vperm.xlu0 %223, %v210
    %v225 = vpop.permute.xlu0 %224
    %228 = vset.pattern.permute.xlu0 0
    %229 = vperm.xlu0 %228, %v211
    %v230 = vpop.permute.xlu0 %229
    %v240 = vrot.slane %v201, 7
    %vm241 = vcmask 1041409
    %v242 = vsel %vm241, %v240, %v200
    %v243 = vrot.slane %v202, 6
    %vm244 = vcmask 1042434
    %v245 = vsel %vm244, %v243, %v242
    %v246 = vrot.slane %v203, 5
    %vm247 = vcmask 1043459
    %v248 = vsel %vm247, %v246, %v245
    %v249 = vrot.slane %v204, 4
    %vm250 = vcmask 1044484
    %v251 = vsel %vm250, %v249, %v248
    %v252 = vrot.slane %v205, 3
    %vm253 = vcmask 1045509
    %v254 = vsel %vm253, %v252, %v251
    %v255 = vrot.slane %v206, 2
    %vm256 = vcmask 1046534
    %v257 = vsel %vm256, %v255, %v254
    %v258 = vrot.slane %v207, 1
    %vm259 = vcmask 1047559
    %v260 = vsel %vm259, %v258, %v257
    %vm261 = vcmask 261120
    %v263 = vsel %vm261, %v192, 0
    %v266 = vsel %vm261, %v193, 0
    %v269 = vsel %vm261, %v194, 0
    %v272 = vsel %vm261, %v195, 0
    %v274 = vsel %vm261, %v260, 0
    %276 = vmatprep.subr.mxu0 0.0
    %277 = vmatpush1.xpose.msra.mxu0 %v274
    %278 = vmatprep.subr.mxu0 0.0
    %279 = vmatpush1.xpose.msra.mxu0 0.0
    %280 = vmatprep.subr.mxu0 0.0
    %281 = vmatpush1.xpose.msra.mxu0 0.0
    %282 = vmatprep.subr.mxu0 0.0
    %283 = vmatpush1.xpose.msra.mxu0 0.0
    %284 = vmatprep.subr.mxu0 0.0
    %285 = vmatpush1.xpose.msra.mxu0 0.0
    %286 = vmatprep.subr.mxu0 0.0
    %287 = vmatpush1.xpose.msra.mxu0 0.0
    %288 = vmatprep.subr.mxu0 0.0
    %289 = vmatpush1.xpose.msra.mxu0 0.0
    %290 = vmatprep.subr.mxu0 0.0
    %291 = vmatpush1.xpose.msra.mxu0 0.0
    %292 = vmatprep.subr.mxu0 0.0
    %293 = vmatpush1.xpose.msra.mxu0 0.0
    %294 = vmatprep.subr.mxu0 0.0
    %295 = vmatpush1.xpose.msra.mxu0 0.0
    %296 = vmatprep.subr.mxu0 0.0
    %297 = vmatpush1.xpose.msra.mxu0 0.0
    %298 = vmatprep.subr.mxu0 0.0
    %299 = vmatpush1.xpose.msra.mxu0 0.0
    %300 = vmatprep.subr.mxu0 0.0
    %301 = vmatpush1.xpose.msra.mxu0 0.0
    %302 = vmatprep.subr.mxu0 0.0
    %303 = vmatpush1.xpose.msra.mxu0 0.0
    %304 = vmatprep.subr.mxu0 0.0
    %305 = vmatpush1.xpose.msra.mxu0 0.0
    %306 = vmatprep.subr.mxu0 0.0
    %307 = vmatpush1.xpose.msra.mxu0 0.0
    %308 = vmatprep.subr.mxu0 0.0
    %309 = vmatpush1.xpose.msra.mxu0 0.0
    %310 = vmatprep.subr.mxu0 0.0
    %311 = vmatpush1.xpose.msra.mxu0 0.0
    %312 = vmatprep.subr.mxu0 0.0
    %313 = vmatpush1.xpose.msra.mxu0 0.0
    %314 = vmatprep.subr.mxu0 0.0
    %315 = vmatpush1.xpose.msra.mxu0 0.0
    %316 = vmatprep.subr.mxu0 0.0
    %317 = vmatpush1.xpose.msra.mxu0 0.0
    %318 = vmatprep.subr.mxu0 0.0
    %319 = vmatpush1.xpose.msra.mxu0 0.0
    %320 = vmatprep.subr.mxu0 0.0
    %321 = vmatpush1.xpose.msra.mxu0 0.0
    %322 = vmatprep.subr.mxu0 0.0
    %323 = vmatpush1.xpose.msra.mxu0 0.0
    %324 = vmatprep.subr.mxu0 0.0
    %325 = vmatpush1.xpose.msra.mxu0 0.0
    %326 = vmatprep.subr.mxu0 0.0
    %327 = vmatpush1.xpose.msra.mxu0 0.0
    %328 = vmatprep.subr.mxu0 0.0
    %329 = vmatpush1.xpose.msra.mxu0 0.0
    %330 = vmatprep.subr.mxu0 0.0
    %331 = vmatpush1.xpose.msra.mxu0 0.0
    %332 = vmatprep.subr.mxu0 0.0
    %333 = vmatpush1.xpose.msra.mxu0 0.0
    %334 = vmatprep.subr.mxu0 0.0
    %335 = vmatpush1.xpose.msra.mxu0 0.0
    %336 = vmatprep.subr.mxu0 0.0
    %337 = vmatpush1.xpose.msra.mxu0 0.0
    %338 = vmatprep.subr.mxu0 0.0
    %339 = vmatpush1.xpose.msra.mxu0 0.0
    %340 = vmatprep.mubr.f32.mxu0 0.0
    %341 = vmatmul.mubr.f32.gmra.mrb[0].mxu0 %v263
    %v342 = vpop.f32.mrb[0].mxu0
    %v343 = vadd.f32 %v215, %v342
    %v344 = vpop.f32.mrb[0].mxu0
    %345 = vmatprep.mubr.f32.mxu0 0.0
    %346 = vmatmul.mubr.f32.gmra.mrb[0].mxu0 %v266
    %v347 = vpop.f32.mrb[0].mxu0
    %v348 = vadd.f32 %v220, %v347
    %v349 = vpop.f32.mrb[0].mxu0
    %350 = vmatprep.mubr.f32.mxu0 0.0
    %351 = vmatmul.mubr.f32.gmra.mrb[0].mxu0 %v269
    %v352 = vpop.f32.mrb[0].mxu0
    %v353 = vadd.f32 %v225, %v352
    %v354 = vpop.f32.mrb[0].mxu0
    %355 = vmatprep.mubr.f32.mxu0 0.0
    %356 = vmatmul.mubr.f32.gmra.mrb[0].mxu0 %v272
    %v357 = vpop.f32.mrb[0].mxu0
    %v358 = vadd.f32 %v230, %v357
    %v359 = vpop.f32.mrb[0].mxu0
    %360 = vdwg.mxu0
    %v361 = vtanh.pop %v343
    %v362 = vtanh.pop %v348
    %v363 = vtanh.pop %v353
    %v364 = vtanh.pop %v358
    %366 = vset.pattern.permute.xlu0 0
    %367 = vperm.xlu0 %366, %v196
    %v368 = vpop.permute.xlu0 %367
    %371 = vset.pattern.permute.xlu0 0
    %372 = vperm.xlu0 %371, %v197
    %v373 = vpop.permute.xlu0 %372
    %376 = vset.pattern.permute.xlu0 0
    %377 = vperm.xlu0 %376, %v198
    %v378 = vpop.permute.xlu0 %377
    %381 = vset.pattern.permute.xlu0 0
    %382 = vperm.xlu0 %381, %v199
    %v383 = vpop.permute.xlu0 %382
    %v385 = vmul.f32 %v361, %v368
    %v386 = vmul.f32 %v362, %v373
    %v387 = vmul.f32 %v363, %v378
    %v388 = vmul.f32 %v364, %v383
    %vm389 = vcmask 64512
    %v390 = vsel %vm389, %v385, 0.0
    %v391 = vsel %vm389, %v386, 0.0
    %v392 = vadd.f32 %v390, %v391
    %v393 = vsel %vm389, %v387, 0.0
    %v394 = vadd.f32 %v392, %v393
    %v395 = vsel %vm389, %v388, 0.0
    %v396 = vadd.f32 %v394, %v395
    %v397 = vrot.slane %v396, 4
    %v398 = vadd.f32 %v396, %v397
    %v399 = vrot.slane %v398, 2
    %v400 = vadd.f32 %v398, %v399
    %v401 = vrot.slane %v400, 1
    %v402 = vadd.f32 %v400, %v401
    %s403 = smul.u32 0, 2
    %s404 = scalar_lea.vmem [#allocation8], %s403
    %vm405 = vcmask 57344
    %406 = vst.msk [vmem:[%s404] sm:$0x1] %vm405, %v402
    %v407 = vld [vmem:[#allocation6 + $0x1] sm:$0x1]
    %v408 = vld [vmem:[#allocation6 + $0x3] sm:$0x1]
    %v409 = vld [vmem:[#allocation6 + $0x5] sm:$0x1]
    %v410 = vld [vmem:[#allocation6 + $0x7] sm:$0x1]
    %v411 = vld [vmem:[#allocation6 + $0x9] sm:$0x1]
    %v412 = vld [vmem:[#allocation6 + $0xb] sm:$0x1]
    %v413 = vld [vmem:[#allocation6 + $0xd] sm:$0x1]
    %v414 = vld [vmem:[#allocation6 + $0xf] sm:$0x1]
    %v415 = vld [vmem:[#allocation2] sm:$0xff]
    %v416 = vld [vmem:[#allocation2 + $0x8] sm:$0xff]
    %v417 = vld [vmem:[#allocation2 + $0x10] sm:$0xff]
    %v418 = vld [vmem:[#allocation2 + $0x18] sm:$0xff]
    %420 = vset.pattern.permute.xlu0 1
    %421 = vperm.xlu0 %420, %v415
    %v422 = vpop.permute.xlu0 %421
    %425 = vset.pattern.permute.xlu0 1
    %426 = vperm.xlu0 %425, %v416
    %v427 = vpop.permute.xlu0 %426
    %430 = vset.pattern.permute.xlu0 1
    %431 = vperm.xlu0 %430, %v417
    %v432 = vpop.permute.xlu0 %431
    %435 = vset.pattern.permute.xlu0 1
    %436 = vperm.xlu0 %435, %v418
    %v437 = vpop.permute.xlu0 %436
    %v447 = vrot.slane %v408, 7
    %v448 = vsel %vm241, %v447, %v407
    %v449 = vrot.slane %v409, 6
    %v450 = vsel %vm244, %v449, %v448
    %v451 = vrot.slane %v410, 5
    %v452 = vsel %vm247, %v451, %v450
    %v453 = vrot.slane %v411, 4
    %v454 = vsel %vm250, %v453, %v452
    %v455 = vrot.slane %v412, 3
    %v456 = vsel %vm253, %v455, %v454
    %v457 = vrot.slane %v413, 2
    %v458 = vsel %vm256, %v457, %v456
    %v459 = vrot.slane %v414, 1
    %v460 = vsel %vm259, %v459, %v458
    %v461 = vsel %vm261, %v460, 0
    %463 = vmatprep.subr.mxu0 0.0
    %464 = vmatpush1.xpose.msra.mxu0 %v461
    %465 = vmatprep.subr.mxu0 0.0
    %466 = vmatpush1.xpose.msra.mxu0 0.0
    %467 = vmatprep.subr.mxu0 0.0
    %468 = vmatpush1.xpose.msra.mxu0 0.0
    %469 = vmatprep.subr.mxu0 0.0
    %470 = vmatpush1.xpose.msra.mxu0 0.0
    %471 = vmatprep.subr.mxu0 0.0
    %472 = vmatpush1.xpose.msra.mxu0 0.0
    %473 = vmatprep.subr.mxu0 0.0
    %474 = vmatpush1.xpose.msra.mxu0 0.0
    %475 = vmatprep.subr.mxu0 0.0
    %476 = vmatpush1.xpose.msra.mxu0 0.0
    %477 = vmatprep.subr.mxu0 0.0
    %478 = vmatpush1.xpose.msra.mxu0 0.0
    %479 = vmatprep.subr.mxu0 0.0
    %480 = vmatpush1.xpose.msra.mxu0 0.0
    %481 = vmatprep.subr.mxu0 0.0
    %482 = vmatpush1.xpose.msra.mxu0 0.0
    %483 = vmatprep.subr.mxu0 0.0
    %484 = vmatpush1.xpose.msra.mxu0 0.0
    %485 = vmatprep.subr.mxu0 0.0
    %486 = vmatpush1.xpose.msra.mxu0 0.0
    %487 = vmatprep.subr.mxu0 0.0
    %488 = vmatpush1.xpose.msra.mxu0 0.0
    %489 = vmatprep.subr.mxu0 0.0
    %490 = vmatpush1.xpose.msra.mxu0 0.0
    %491 = vmatprep.subr.mxu0 0.0
    %492 = vmatpush1.xpose.msra.mxu0 0.0
    %493 = vmatprep.subr.mxu0 0.0
    %494 = vmatpush1.xpose.msra.mxu0 0.0
    %495 = vmatprep.subr.mxu0 0.0
    %496 = vmatpush1.xpose.msra.mxu0 0.0
    %497 = vmatprep.subr.mxu0 0.0
    %498 = vmatpush1.xpose.msra.mxu0 0.0
    %499 = vmatprep.subr.mxu0 0.0
    %500 = vmatpush1.xpose.msra.mxu0 0.0
    %501 = vmatprep.subr.mxu0 0.0
    %502 = vmatpush1.xpose.msra.mxu0 0.0
    %503 = vmatprep.subr.mxu0 0.0
    %504 = vmatpush1.xpose.msra.mxu0 0.0
    %505 = vmatprep.subr.mxu0 0.0
    %506 = vmatpush1.xpose.msra.mxu0 0.0
    %507 = vmatprep.subr.mxu0 0.0
    %508 = vmatpush1.xpose.msra.mxu0 0.0
    %509 = vmatprep.subr.mxu0 0.0
    %510 = vmatpush1.xpose.msra.mxu0 0.0
    %511 = vmatprep.subr.mxu0 0.0
    %512 = vmatpush1.xpose.msra.mxu0 0.0
    %513 = vmatprep.subr.mxu0 0.0
    %514 = vmatpush1.xpose.msra.mxu0 0.0
    %515 = vmatprep.subr.mxu0 0.0
    %516 = vmatpush1.xpose.msra.mxu0 0.0
    %517 = vmatprep.subr.mxu0 0.0
    %518 = vmatpush1.xpose.msra.mxu0 0.0
    %519 = vmatprep.subr.mxu0 0.0
    %520 = vmatpush1.xpose.msra.mxu0 0.0
    %521 = vmatprep.subr.mxu0 0.0
    %522 = vmatpush1.xpose.msra.mxu0 0.0
    %523 = vmatprep.subr.mxu0 0.0
    %524 = vmatpush1.xpose.msra.mxu0 0.0
    %525 = vmatprep.subr.mxu0 0.0
    %526 = vmatpush1.xpose.msra.mxu0 0.0
    %527 = vmatprep.mubr.f32.mxu0 0.0
    %528 = vmatmul.mubr.f32.gmra.mrb[0].mxu0 %v263
    %v529 = vpop.f32.mrb[0].mxu0
    %v530 = vadd.f32 %v422, %v529
    %v531 = vpop.f32.mrb[0].mxu0
    %532 = vmatprep.mubr.f32.mxu0 0.0
    %533 = vmatmul.mubr.f32.gmra.mrb[0].mxu0 %v266
    %v534 = vpop.f32.mrb[0].mxu0
    %v535 = vadd.f32 %v427, %v534
    %v536 = vpop.f32.mrb[0].mxu0
    %537 = vmatprep.mubr.f32.mxu0 0.0
    %538 = vmatmul.mubr.f32.gmra.mrb[0].mxu0 %v269
    %v539 = vpop.f32.mrb[0].mxu0
    %v540 = vadd.f32 %v432, %v539
    %v541 = vpop.f32.mrb[0].mxu0
    %542 = vmatprep.mubr.f32.mxu0 0.0
    %543 = vmatmul.mubr.f32.gmra.mrb[0].mxu0 %v272
    %v544 = vpop.f32.mrb[0].mxu0
    %v545 = vadd.f32 %v437, %v544
    %v546 = vpop.f32.mrb[0].mxu0
    %547 = vdwg.mxu0
    %v548 = vtanh.pop %v530
    %v549 = vtanh.pop %v535
    %v550 = vtanh.pop %v540
    %v551 = vtanh.pop %v545
    %v552 = vmul.f32 %v548, %v368
    %v553 = vmul.f32 %v549, %v373
    %v554 = vmul.f32 %v550, %v378
    %v555 = vmul.f32 %v551, %v383
    %v556 = vsel %vm389, %v552, 0.0
    %v557 = vsel %vm389, %v553, 0.0
    %v558 = vadd.f32 %v556, %v557
    %v559 = vsel %vm389, %v554, 0.0
    %v560 = vadd.f32 %v558, %v559
    %v561 = vsel %vm389, %v555, 0.0
    %v562 = vadd.f32 %v560, %v561
    %v563 = vrot.slane %v562, 4
    %v564 = vadd.f32 %v562, %v563
    %v565 = vrot.slane %v564, 2
    %v566 = vadd.f32 %v564, %v565
    %v567 = vrot.slane %v566, 1
    %v568 = vadd.f32 %v566, %v567
    %569 = vst.msk [vmem:[%s404 + $0x1] sm:$0x1] %vm405, %v568
    // Predicated region
    $region42: #{tpu_custom_call.1} parent=1 // pred_check
      %p570 = pneg %p53
    $region43: #{tpu_custom_call.1} parent=1 // pred_check_branch
      %572 = sbr.rel (%p570) target = $region45
    $region44: #{tpu_custom_call.1} parent=1 // pred_region
      %v573 = vld [vmem:[#allocation8] sm:$0x3]
      %v574 = vld [vmem:[%s2] sm:$0x3]
      %vm575 = vcmp.eq.f32.partialorder %v574, 0.0
      %v576 = vsel %vm575, -1e+10, %v573
      %v577 = vlaneseq
      %v578 = vand.u32 %v577, 127
      %vm579 = vcmp.lt.s32.totalorder %v578, 8
      %v580 = vsel %vm579, %v576, -1e+30
      %vm581 = vcmask 58368
      %v582 = vsel %vm581, %v580, -inf
      %583 = vmax.xlane.f32.xlu0 %v582
      %v584 = vpop.xlane.xlu0 %583
      %v585 = vsub.f32 %v580, %v584
      %v586 = vmul.f32 %v585, 1.442695
      %v587 = vpow.pop %v586
      %v588 = vsel %vm581, %v587, 0.0
      %589 = vadd.xlane.f32.xlu0 %v588
      %v590 = vpop.xlane.xlu0 %589
      %v591 = vadd.f32 %v590, 0.0
      %v592 = vrcp.pop %v591
      %v593 = vmul.f32 %v587, %v592
      %594 = vst.msk [vmem:[#allocation8] sm:$0x3] %vm581, %v593
    $region45: #{tpu_custom_call.1} parent=1 // pred_fallthru
      _
    // Predicated region
    $region46: #{tpu_custom_call.1} parent=1 // pred_check
      _
    $region47: #{tpu_custom_call.1} parent=1 // pred_check_branch
      %596 = sbr.rel (0) target = $region49
    $region48: #{tpu_custom_call.1} parent=1 // pred_region
      %s598 = ssub.s32 32, 32
      %599 = vsyncadd [#allocation5], %s598
      %s601 = sshll.u32 [#allocation8], 4
      %s602 = int_to_ptr.vmem [resolvable:$true] %s601
      %604 = dma.vmem_to_hbm [thread:$0]  %s602, 32, %s7, [#allocation5]
    $region49: #{tpu_custom_call.1} parent=1 // pred_fallthru
      _
    // Predicated region
    $region50: #{tpu_custom_call.1} parent=1 // pred_check
      _
    $region51: #{tpu_custom_call.1} parent=1 // pred_check_branch
      %606 = sbr.rel (0) target = $region53
    $region52: #{tpu_custom_call.1} parent=1 // pred_region
      %607 = dma.done [#allocation5], 32
    $region53: #{tpu_custom_call.1} parent=1 // pred_fallthru
      _
    %608 = vsyncpa [#allocation4], 1
    %609 = vsyncpa [#allocation7], 1
    %610 = vsyncpa [#allocation5], 1

</llo_original>
